<compile_context>
chip_gen: v5e
topology: v5e:2x2
jax: 0.10.0
libtpu: 0.0.40
codegen_flags: <defaults>
</compile_context>

<pallas_src>
import numpy as np
import jax
import jax.numpy as jnp
from jax.experimental import pallas as pl
from jax.experimental.pallas import tpu as pltpu

BN_EPS = 1e-5  # nn.BatchNorm2d default eps
LANES = 128


# --------------------------- pass 1: conv + BN partials ------------------------
def _conv_stats_kernel(p_ref, w_ref, y_ref, st_ref):
    # One fused im2col matmul (bf16 operands, f32 accumulate) on the MXU.
    acc = jnp.dot(p_ref[...], w_ref[...], preferred_element_type=jnp.float32)
    y_ref[...] = acc.astype(y_ref.dtype)
    # Per-tile per-channel BN partials (sum, sum-of-squares) from the f32
    # accumulator, emitted as a single lane-dense (2, Cout_p) store.
    s = jnp.sum(acc, axis=0, keepdims=True)
    sq = jnp.sum(acc * acc, axis=0, keepdims=True)
    st_ref[...] = jnp.concatenate([s, sq], axis=0)


# --------------------- pass 2: BN-affine + ReLU + emb broadcast ----------------
def _bn_relu_emb_kernel(y_ref, scale_ref, shift_ref, emb_ref, o_ref):
    y = y_ref[...].astype(jnp.float32) * scale_ref[...] + shift_ref[...]
    y = jnp.maximum(y, 0.0)
    o_ref[...] = (y + emb_ref[...]).astype(o_ref.dtype)


# ------------------------------ tiling helpers ---------------------------------
def _vmem_capacity_bytes():
    try:
        cap = getattr(pltpu.get_tpu_info(), "vmem_capacity_bytes", None)
        if cap:
            return int(cap)
    except Exception:
        pass
    return 64 << 20  # conservative fallback: v7x per-TensorCore VMEM


def _pick_tile_m(hw, n_batch, bytes_per_row, budget, fixed_bytes=0, min_steps=2):
    """Largest divisor of hw (multiple of 8, or hw itself) whose double-buffered
    per-step working set fits `budget`, preferring choices that leave at least
    `min_steps` parallel grid steps (keeps both v7x TensorCores busy)."""
    divisors = [d for d in range(1, hw + 1)
                if hw % d == 0 and (d % 8 == 0 or d == hw)]
    fitting = [d for d in divisors
               if fixed_bytes + 2 * d * bytes_per_row <= budget] or [min(divisors)]
    preferred = [d for d in fitting if n_batch * (hw // d) >= min_steps]
    return max(preferred) if preferred else max(fitting)


# ------------------------------- forward pass ----------------------------------
def down_forward(x_nchw, t, params):
    """Pallas implementation of Down.forward(x, t). x is NCHW (PyTorch layout)."""
    N, Cin, H, W = x_nchw.shape
    Hh, Wh = H // 2, W // 2
    HW = Hh * Wh
    Cout = params["conv_w"].shape[0]
    K9 = 9 * Cin
    Cout_p = ((Cout + LANES - 1) // LANES) * LANES  # lane-dense padded channels

    # ---- XLA-side layout prep (kernels stay matmul / stream bound) -------------
    # TODO(synk): at real UNet widths keep activations NHWC end-to-end and build
    # the 3x3 halo inside the kernel (manual DMA of a (tile_rows+2, W+2, Cin)
    # slab + 9 accumulating matmuls) instead of materializing the 9x im2col.
    x_nhwc = jnp.transpose(x_nchw, (0, 2, 3, 1))
    pooled = x_nhwc.reshape(N, Hh, 2, Wh, 2, Cin).max(axis=(2, 4))       # (N,Hh,Wh,Cin)
    padded = jnp.pad(pooled, ((0, 0), (1, 1), (1, 1), (0, 0)))
    patches = jnp.stack(
        [padded[:, kh:kh + Hh, kw:kw + Wh, :] for kh in range(3) for kw in range(3)],
        axis=3).reshape(N, HW, K9).astype(jnp.bfloat16)                  # (N,HW,9*Cin)

    # Conv weight (Cout, Cin, 3, 3) -> (9*Cin, Cout_p), tap-major / cin-minor,
    # zero-padded on the output-channel (lane) dim, bf16 for the MXU.
    wconv = jnp.transpose(params["conv_w"], (2, 3, 1, 0)).reshape(K9, Cout)
    wconv = jnp.pad(wconv, ((0, 0), (0, Cout_p - Cout))).astype(jnp.bfloat16)
    # Conv bias intentionally dropped: training-mode BN's mean subtraction cancels it.

    # Tiny emb branch (SiLU -> Linear) computed once in XLA, padded to Cout_p.
    emb = (jax.nn.silu(t.astype(jnp.float32))
           @ params["lin_w"].astype(jnp.float32).T
           + params["lin_b"].astype(jnp.float32))
    emb = jnp.pad(emb, ((0, 0), (0, Cout_p - Cout))).reshape(N, 1, Cout_p)

    # ---- generation-aware VMEM budgeting ----------------------------------------
    cap = _vmem_capacity_bytes()
    tile_budget = (cap * 3) // 8                   # ~24 MiB on v7x, ~48 MiB on v5e/v6e
    vmem_limit = int(min((cap * 3) // 4, 100 << 20))
    cparams = pltpu.CompilerParams(
        dimension_semantics=("parallel", "parallel"),
        vmem_limit_bytes=vmem_limit,
    )

    # ---- pass 1: fused im2col conv matmul + per-tile BN partials ----------------
    w_bytes = K9 * Cout_p * 2
    tile_m1 = _pick_tile_m(HW, N, (K9 + Cout_p) * 2, tile_budget, fixed_bytes=w_bytes)
    nt1 = HW // tile_m1
    conv_out, stats = pl.pallas_call(
        _conv_stats_kernel,
        grid=(N, nt1),
        in_specs=[
            pl.BlockSpec((None, tile_m1, K9), lambda n, m: (n, m, 0)),
            pl.BlockSpec((K9, Cout_p), lambda n, m: (0, 0)),
        ],
        out_specs=(
            pl.BlockSpec((None, tile_m1, Cout_p), lambda n, m: (n, m, 0)),
            pl.BlockSpec((None, None, 2, Cout_p), lambda n, m: (n, m, 0, 0)),
        ),
        out_shape=(
            jax.ShapeDtypeStruct((N, HW, Cout_p), jnp.bfloat16),
            jax.ShapeDtypeStruct((N, nt1, 2, Cout_p), jnp.float32),
        ),
        compiler_params=cparams,
    )(patches, wconv)

    # ---- BN batch statistics: Chan-style merge of per-tile partials (XLA, tiny) --
    m_tot = N * HW
    sums = stats[:, :, 0, :Cout]                          # (N, nt1, Cout)
    sqs = stats[:, :, 1, :Cout]
    mean_t = sums / tile_m1
    m2_t = sqs - sums * mean_t                            # per-tile centered M2
    mean = jnp.sum(sums, axis=(0, 1)) / m_tot
    m2 = (jnp.sum(m2_t, axis=(0, 1))
          + tile_m1 * jnp.sum((mean_t - mean) ** 2, axis=(0, 1)))
    var = jnp.maximum(m2 / m_tot, 0.0)                    # biased var (PyTorch train BN)
    inv = jax.lax.rsqrt(var + BN_EPS)
    scale = params["bn_w"].astype(jnp.float32) * inv
    shift = params["bn_b"].astype(jnp.float32) - mean * scale
    scale = jnp.pad(scale, (0, Cout_p - Cout)).reshape(1, Cout_p)
    shift = jnp.pad(shift, (0, Cout_p - Cout)).reshape(1, Cout_p)

    # ---- pass 2: fused BN-affine + ReLU + emb broadcast (pure streaming) ---------
    out_dtype = x_nchw.dtype
    out_bytes = jnp.dtype(out_dtype).itemsize
    tile_m2 = _pick_tile_m(HW, N, (2 + out_bytes) * Cout_p, tile_budget)
    nt2 = HW // tile_m2
    out = pl.pallas_call(
        _bn_relu_emb_kernel,
        grid=(N, nt2),
        in_specs=[
            pl.BlockSpec((None, tile_m2, Cout_p), lambda n, m: (n, m, 0)),
            pl.BlockSpec((1, Cout_p), lambda n, m: (0, 0)),
            pl.BlockSpec((1, Cout_p), lambda n, m: (0, 0)),
            pl.BlockSpec((None, 1, Cout_p), lambda n, m: (n, 0, 0)),
        ],
        out_specs=pl.BlockSpec((None, tile_m2, Cout_p), lambda n, m: (n, m, 0)),
        out_shape=jax.ShapeDtypeStruct((N, HW, Cout_p), out_dtype),
        compiler_params=cparams,
    )(conv_out, scale, shift, emb)

    # Slice off channel padding; back to PyTorch NCHW.
    # TODO(synk): drop this transpose by keeping the surrounding model NHWC.
    return jnp.transpose(out[:, :, :Cout].reshape(N, Hh, Wh, Cout), (0, 3, 1, 2))


# ------------------------------- reference -------------------------------------
def down_reference(x_nchw, t, params):
    """Pure-JAX f32 reference mirroring the PyTorch forward (sanity check)."""
    N, Cin, H, W = x_nchw.shape
    xp = x_nchw.reshape(N, Cin, H // 2, 2, W // 2, 2).max(axis=(3, 5))
    x_nhwc = jnp.transpose(xp, (0, 2, 3, 1))
    w_hwio = jnp.transpose(params["conv_w"], (2, 3, 1, 0))
    y = jax.lax.conv_general_dilated(
        x_nhwc, w_hwio, (1, 1), "SAME",
        dimension_numbers=("NHWC", "HWIO", "NHWC"))
    y = y + params["conv_b"]
    mean = y.mean(axis=(0, 1, 2))
    var = ((y - mean) ** 2).mean(axis=(0, 1, 2))
    y = (y - mean) * jax.lax.rsqrt(var + BN_EPS) * params["bn_w"] + params["bn_b"]
    y = jnp.maximum(y, 0.0)
    emb = (t * jax.nn.sigmoid(t)) @ params["lin_w"].T + params["lin_b"]
    out = y + emb[:, None, None, :]
    return jnp.transpose(out, (0, 3, 1, 2))


if __name__ == "__main__":
    key = jax.random.PRNGKey(0)
    N, Cin, H, W = 2, 4, 16, 16
    Cout, emb_dim = 8, 32
    ks = jax.random.split(key, 6)

    x = jax.random.normal(ks[0], (N, Cin, H, W), jnp.float32)
    t = jax.random.normal(ks[1], (N, emb_dim), jnp.float32)

    # Parameter shapes match nn.Conv2d / nn.BatchNorm2d / nn.Linear.
    params = {
        "conv_w": jax.random.normal(ks[2], (Cout, Cin, 3, 3), jnp.float32) * 0.1,
        "conv_b": jax.random.normal(ks[3], (Cout,), jnp.float32) * 0.1,
        "bn_w": jnp.ones((Cout,), jnp.float32),    # BatchNorm2d default init
        "bn_b": jnp.zeros((Cout,), jnp.float32),
        "lin_w": jax.random.normal(ks[4], (Cout, emb_dim), jnp.float32) * 0.1,
        "lin_b": jax.random.normal(ks[5], (Cout,), jnp.float32) * 0.1,
    }

    out = jax.block_until_ready(down_forward(x, t, params))
    assert out.shape == (N, Cout, H // 2, W // 2), out.shape

    ref = down_reference(x, t, params)
    # bf16 MXU operands + bf16 conv intermediate -> widened tolerance vs f32 ref.
    np.testing.assert_allclose(np.asarray(out), np.asarray(ref), atol=5e-2, rtol=5e-2)

    print("KERNEL_OK")
</pallas_src>

<mosaic_0001>
module attributes {stable_mosaic.version = 11 : i64} {
  func.func @_conv_stats_kernel(%arg0: i32, %arg1: i32, %arg2: memref<1x64x36xbf16, #tpu.memory_space<vmem>>, %arg3: memref<36x128xbf16, #tpu.memory_space<vmem>>, %arg4: memref<1x64x128xbf16, #tpu.memory_space<vmem>>, %arg5: memref<1x1x2x128xf32, #tpu.memory_space<vmem>>) attributes {dimension_semantics = [#tpu.dimension_semantics<parallel>, #tpu.dimension_semantics<parallel>], iteration_bounds = array<i64: 2, 1>, scalar_prefetch = 0 : i64, scratch_operands = 0 : i64, tpu.core_type = #tpu.core_type<tc>, window_params = [{transform_indices = @transform_0, window_bounds = array<i64: 1, 64, 36>}, {pipeline_mode = #tpu.pipeline_mode<synchronous>, transform_indices = @transform_1, window_bounds = array<i64: 36, 128>}, {transform_indices = @transform_2, window_bounds = array<i64: 1, 64, 128>}, {transform_indices = @transform_3, window_bounds = array<i64: 1, 1, 2, 128>}]} {
    %c0 = arith.constant 0 : index
    %c0_0 = arith.constant 0 : index
    %c0_1 = arith.constant 0 : index
    %0 = vector.load %arg2[%c0, %c0_0, %c0_1] : memref<1x64x36xbf16, #tpu.memory_space<vmem>>, vector<1x64x36xbf16>
    %1 = vector.shape_cast %0 : vector<1x64x36xbf16> to vector<64x36xbf16>
    %c0_2 = arith.constant 0 : index
    %c0_3 = arith.constant 0 : index
    %2 = vector.load %arg3[%c0_2, %c0_3] : memref<36x128xbf16, #tpu.memory_space<vmem>>, vector<36x128xbf16>
    %cst = arith.constant dense<0.000000e+00> : vector<64x128xf32>
    %3 = tpu.matmul %1, %2, %cst {dimension_numbers = #tpu.dot_dimension_numbers<[1], [0], [0], [1], [0, 0, 1, 1], [], []>} : vector<64x36xbf16>, vector<36x128xbf16>, vector<64x128xf32> -> vector<64x128xf32>
    %4 = arith.truncf %3 : vector<64x128xf32> to vector<64x128xbf16>
    %c0_4 = arith.constant 0 : index
    %c0_5 = arith.constant 0 : index
    %c0_6 = arith.constant 0 : index
    %5 = vector.load %arg4[%c0_4, %c0_5, %c0_6] : memref<1x64x128xbf16, #tpu.memory_space<vmem>>, vector<1x64x128xbf16>
    %6 = vector.shape_cast %5 : vector<1x64x128xbf16> to vector<64x128xbf16>
    %7 = vector.shape_cast %4 : vector<64x128xbf16> to vector<1x64x128xbf16>
    tpu.vector_store %arg4[%c0_4, %c0_5, %c0_6], %7 {strides = array<i32>} : memref<1x64x128xbf16, #tpu.memory_space<vmem>>, vector<1x64x128xbf16>,
    %cst_7 = arith.constant dense<0.000000e+00> : vector<128xf32>
    %8 = vector.multi_reduction <add>, %3, %cst_7 [0] : vector<64x128xf32> to vector<128xf32>
    %9 = vector.shape_cast %8 : vector<128xf32> to vector<1x128xf32>
    %10 = arith.mulf %3, %3 : vector<64x128xf32>
    %cst_8 = arith.constant dense<0.000000e+00> : vector<128xf32>
    %11 = vector.multi_reduction <add>, %10, %cst_8 [0] : vector<64x128xf32> to vector<128xf32>
    %12 = vector.shape_cast %11 : vector<128xf32> to vector<1x128xf32>
    %13 = tpu.concatenate %9, %12 in 0 : vector<1x128xf32>, vector<1x128xf32> -> vector<2x128xf32>
    %c0_9 = arith.constant 0 : index
    %c0_10 = arith.constant 0 : index
    %c0_11 = arith.constant 0 : index
    %c0_12 = arith.constant 0 : index
    %14 = vector.load %arg5[%c0_9, %c0_10, %c0_11, %c0_12] : memref<1x1x2x128xf32, #tpu.memory_space<vmem>>, vector<1x1x2x128xf32>
    %15 = vector.shape_cast %14 : vector<1x1x2x128xf32> to vector<2x128xf32>
    %16 = vector.shape_cast %13 : vector<2x128xf32> to vector<1x1x2x128xf32>
    tpu.vector_store %arg5[%c0_9, %c0_10, %c0_11, %c0_12], %16 {strides = array<i32>} : memref<1x1x2x128xf32, #tpu.memory_space<vmem>>, vector<1x1x2x128xf32>,
    return
  }
  func.func @transform_0(%arg0: i32, %arg1: i32) -> (i32, i32, i32) {
    %c0_i32 = arith.constant 0 : i32
    %c0_i32_0 = arith.constant 0 : i32
    return %arg0, %arg1, %c0_i32 : i32, i32, i32
  }
  func.func @transform_1(%arg0: i32, %arg1: i32) -> (i32, i32) {
    %c0_i32 = arith.constant 0 : i32
    %c0_i32_0 = arith.constant 0 : i32
    %c0_i32_1 = arith.constant 0 : i32
    return %c0_i32, %c0_i32_0 : i32, i32
  }
  func.func @transform_2(%arg0: i32, %arg1: i32) -> (i32, i32, i32) {
    %c0_i32 = arith.constant 0 : i32
    %c0_i32_0 = arith.constant 0 : i32
    return %arg0, %arg1, %c0_i32 : i32, i32, i32
  }
  func.func @transform_3(%arg0: i32, %arg1: i32) -> (i32, i32, i32, i32) {
    %c0_i32 = arith.constant 0 : i32
    %c0_i32_0 = arith.constant 0 : i32
    %c0_i32_1 = arith.constant 0 : i32
    return %arg0, %arg1, %c0_i32, %c0_i32_0 : i32, i32, i32, i32
  }
}

</mosaic_0001>

<llo_original>
// kernel: tpu_custom_call.1
$region0: #{tpu_custom_call.1}
  #allocation0 [shape = 'u32[]', space=smem, size = 0x4, offset = 0x4, fixed_abs, tag = 'smem constant byte address 0x4 - core index']
  #allocation1 [shape = 'u32[72,128]{1,0:T(1,128)}', space=vmem, size = 0x9000, scoped, tag = 'internal scratch']
  %s0 = inlined_call_operand.vmem [shape: bf16[2,64,36], index: 0, kind: input, shape index: {}]
  %s1 = inlined_call_operand.vmem [shape: bf16[36,128], index: 1, kind: input, shape index: {}]
  %s2 = inlined_call_operand.hbm [shape: bf16[2,64,128], index: 2, kind: output, shape index: {0}]
  %s3 = inlined_call_operand.hbm [shape: f32[2,1,2,128], index: 3, kind: output, shape index: {1}]
  %4 = xla_tuple %s2, %s3
  %s5 = sld [smem:[#allocation0]]
  $region49: #{tpu_custom_call.1} parent=0
    _
  %s7 = ssub.s32 1, %s5
  %s8 = scalar_select 0, %s7, %s5
  $region1: #{tpu_custom_call.1} parent=0
    #allocation2 [shape = 'u8[32768]{0}', space=vmem, size = 0x8000, scoped, tag = 'output window, operand 0']
    #allocation3 [shape = 's32[2]{0}', space=sflag, size = 0x8, scoped, tag = 'scoped memory for tpu_custom_call.1']
    #allocation4 [shape = 'u8[2048]{0}', space=vmem, size = 0x800, scoped, tag = 'output window, operand 1']
    #allocation5 [shape = 's32[2]{0}', space=sflag, size = 0x8, scoped, tag = 'scoped memory for tpu_custom_call.1']
    %9 = vsyncpa [#allocation3], 0
    %s10 = scalar_lea.sflag [#allocation3], 1
    %11 = vsyncpa %s10, 0
    %12 = vsyncpa [#allocation5], 0
    %s13 = scalar_lea.sflag [#allocation5], 1
    %14 = vsyncpa %s13, 0
    loop: start=0, step=1, limit=4
    $region2: #{tpu_custom_call.1} parent=1 // loop_pre_header
      _
    $region3: #{tpu_custom_call.1} parent=1 // loop_header
      %s16 = sphi 0, %s20
      %p17 = scmp.ge.s32.totalorder %s16, 4
      %s23 = sphi 0, %s35
      %s24 = sphi 0, %s31
      %s25 = sphi 0, %s23
      %s26 = sphi 0, %s24
      %s27 = sphi 0, %s25
      %s28 = sphi 0, %s26
      %s40 = sphi 0, %s42
      %s43 = sphi 0, %s40
      %s44 = sphi 0, %s43
      %s60 = sphi 0, %s44
      %s64 = sphi 0, %s64
      %s66 = sphi 0, %s64
      %s67 = sphi 0, %s66
      %s81 = sphi 0, %s67
      %s89 = sphi 0, %s91
      %s92 = sphi 0, %s89
      %s93 = sphi 0, %s92
      %s109 = sphi 0, %s93
      %s117 = sphi 0, %s119
      %s120 = sphi 0, %s117
      %s121 = sphi 0, %s120
      %s137 = sphi 0, %s121
    $region4: #{tpu_custom_call.1} parent=1 // loop_header_branch
      %19 = sbr.rel (%p17) target = $region8
    $region5: #{tpu_custom_call.1} parent=1 // loop_body
      %s21 = ssub.s32 %s16, 1
      %s22 = ssub.s32 %s16, 2
      %s29 = sadd.s32 1, %s24
      %p30 = scmp.ge.s32.totalorder %s29, 1
      %s31 = scalar_select %p30, 0, %s29
      %s32 = sadd.s32 1, %s23
      %s33 = scalar_select %p30, %s32, %s23
      %p34 = scmp.ge.s32.totalorder %s33, 2
      %s35 = scalar_select %p34, 0, %s33
      %s36 = ssub.s32 %s23, %s35
      %s37 = ssub.s32 %s24, %s31
      %s38 = sor.u32 %s36, %s37
      %p39 = scmp.eq.s32.totalorder %s38, 0
      %s41 = sadd.s32 %s40, 1
      %s42 = scalar_select %p39, %s40, %s41
      %p45 = pneg %p39
      %p46 = scmp.eq.s32.totalorder %s16, 1
      %p47 = por %p45, %p46
      %p48 = scmp.ne.s32.totalorder %s40, %s43
      %p49 = scmp.eq.s32.totalorder %s16, 0
      %p50 = por %p48, %p49
      %p51 = scmp.ne.s32.totalorder %s40, %s43
      %p52 = scmp.eq.s32.totalorder %s21, 1
      %p53 = por %p51, %p52
      %p54 = scmp.ne.s32.totalorder %s43, %s44
      %p55 = scmp.eq.s32.totalorder %s21, 0
      %p56 = por %p54, %p55
      %p57 = scmp.ne.s32.totalorder %s43, %s44
      %p58 = scmp.eq.s32.totalorder %s22, 1
      %p59 = por %p57, %p58
      %p61 = scmp.ne.s32.totalorder %s44, %s60
      %p62 = scmp.eq.s32.totalorder %s22, 0
      %p63 = por %p61, %p62
      %s65 = sadd.s32 %s64, 1
      %p68 = scmp.eq.s32.totalorder %s16, 1
      %p69 = scmp.ne.s32.totalorder %s64, %s66
      %p70 = scmp.eq.s32.totalorder %s16, 0
      %p71 = por %p69, %p70
      %p72 = scmp.ne.s32.totalorder %s64, %s66
      %p73 = scmp.eq.s32.totalorder %s21, 1
      %p74 = por %p72, %p73
      %p75 = scmp.ne.s32.totalorder %s66, %s67
      %p76 = scmp.eq.s32.totalorder %s21, 0
      %p77 = por %p75, %p76
      %p78 = scmp.ne.s32.totalorder %s66, %s67
      %p79 = scmp.eq.s32.totalorder %s22, 1
      %p80 = por %p78, %p79
      %p82 = scmp.ne.s32.totalorder %s67, %s81
      %p83 = scmp.eq.s32.totalorder %s22, 0
      %p84 = por %p82, %p83
      %s85 = ssub.s32 %s23, %s35
      %s86 = ssub.s32 %s24, %s31
      %s87 = sor.u32 %s85, %s86
      %p88 = scmp.eq.s32.totalorder %s87, 0
      %s90 = sadd.s32 %s89, 1
      %s91 = scalar_select %p88, %s89, %s90
      %p94 = pneg %p88
      %p95 = scmp.eq.s32.totalorder %s16, 1
      %p96 = por %p94, %p95
      %p97 = scmp.ne.s32.totalorder %s89, %s92
      %p98 = scmp.eq.s32.totalorder %s16, 0
      %p99 = por %p97, %p98
      %p100 = scmp.ne.s32.totalorder %s89, %s92
      %p101 = scmp.eq.s32.totalorder %s21, 1
      %p102 = por %p100, %p101
      %p103 = scmp.ne.s32.totalorder %s92, %s93
      %p104 = scmp.eq.s32.totalorder %s21, 0
      %p105 = por %p103, %p104
      %p106 = scmp.ne.s32.totalorder %s92, %s93
      %p107 = scmp.eq.s32.totalorder %s22, 1
      %p108 = por %p106, %p107
      %p110 = scmp.ne.s32.totalorder %s93, %s109
      %p111 = scmp.eq.s32.totalorder %s22, 0
      %p112 = por %p110, %p111
      %s113 = ssub.s32 %s23, %s35
      %s114 = ssub.s32 %s24, %s31
      %s115 = sor.u32 %s113, %s114
      %p116 = scmp.eq.s32.totalorder %s115, 0
      %s118 = sadd.s32 %s117, 1
      %s119 = scalar_select %p116, %s117, %s118
      %p122 = pneg %p116
      %p123 = scmp.eq.s32.totalorder %s16, 1
      %p124 = por %p122, %p123
      %p125 = scmp.ne.s32.totalorder %s117, %s120
      %p126 = scmp.eq.s32.totalorder %s16, 0
      %p127 = por %p125, %p126
      %p128 = scmp.ne.s32.totalorder %s117, %s120
      %p129 = scmp.eq.s32.totalorder %s21, 1
      %p130 = por %p128, %p129
      %p131 = scmp.ne.s32.totalorder %s120, %s121
      %p132 = scmp.eq.s32.totalorder %s21, 0
      %p133 = por %p131, %p132
      %p134 = scmp.ne.s32.totalorder %s120, %s121
      %p135 = scmp.eq.s32.totalorder %s22, 1
      %p136 = por %p134, %p135
      %p138 = scmp.ne.s32.totalorder %s121, %s137
      %p139 = scmp.eq.s32.totalorder %s22, 0
      %p140 = por %p138, %p139
      %p141 = scmp.le.s32.totalorder 1, %s16
      %p142 = scmp.lt.s32.totalorder %s16, 3
      %p143 = pnand %p141, %p142
      %p144 = pneg %p143
      // Predicated region
      $region9: #{tpu_custom_call.1} parent=5 // pred_check
        _
      $region10: #{tpu_custom_call.1} parent=5 // pred_check_branch
        %146 = sbr.rel (%p143) target = $region12
      $region11: #{tpu_custom_call.1} parent=5 // pred_region
        %s147 = ssub.s32 %s16, 1
        // Predicated region
        $region13: #{tpu_custom_call.1} parent=11 // pred_check
          %p148 = pneg %p77
        $region14: #{tpu_custom_call.1} parent=11 // pred_check_branch
          %150 = sbr.rel (%p148) target = $region16
        $region15: #{tpu_custom_call.1} parent=11 // pred_region
          _
        $region16: #{tpu_custom_call.1} parent=11 // pred_fallthru
          _
      $region12: #{tpu_custom_call.1} parent=5 // pred_fallthru
        _
      %p151 = scmp.lt.s32.totalorder %s16, 2
      // Predicated region
      $region17: #{tpu_custom_call.1} parent=5 // pred_check
        %p152 = pneg %p151
      $region18: #{tpu_custom_call.1} parent=5 // pred_check_branch
        %154 = sbr.rel (%p152) target = $region20
      $region19: #{tpu_custom_call.1} parent=5 // pred_region
        // Predicated region
        $region21: #{tpu_custom_call.1} parent=19 // pred_check
          %p155 = pneg %p50
        $region22: #{tpu_custom_call.1} parent=19 // pred_check_branch
          %157 = sbr.rel (%p155) target = $region24
        $region23: #{tpu_custom_call.1} parent=19 // pred_region
          %s158 = smul.u32 8, %s24
          %p159 = scmp.lt.s32.totalorder %s23, 1
          %s160 = scalar_select %p159, %s23, 1
          %p161 = scmp.lt.s32.totalorder %s158, 7
          %s162 = scalar_select %p161, %s158, 7
          %s163 = smul.addr %s160, 8
          %s164 = sadd.s32 %s162, %s163
          %s165 = smul.addr %s164, 4
          %s166 = scalar_lea.vmem %s0, %s165
          %s167 = smul.u32 8, %s24
        $region24: #{tpu_custom_call.1} parent=19 // pred_fallthru
          _
      $region20: #{tpu_custom_call.1} parent=5 // pred_fallthru
        _
      %p168 = scmp.le.s32.totalorder 1, %s16
      %p169 = scmp.lt.s32.totalorder %s16, 3
      %p170 = pnand %p168, %p169
      %p171 = pneg %p170
      // Predicated region
      $region25: #{tpu_custom_call.1} parent=5 // pred_check
        _
      $region26: #{tpu_custom_call.1} parent=5 // pred_check_branch
        %173 = sbr.rel (%p170) target = $region28
      $region27: #{tpu_custom_call.1} parent=5 // pred_region
        %s174 = ssub.s32 %s16, 1
        %s175 = smul.u32 8, %s26
        %p176 = scmp.lt.s32.totalorder %s25, 1
        %s177 = scalar_select %p176, %s25, 1
        %p178 = scmp.lt.s32.totalorder %s175, 7
        %s179 = scalar_select %p178, %s175, 7
        %s180 = smul.addr %s177, 8
        %s181 = sadd.s32 %s179, %s180
        %s182 = smul.addr %s181, 4
        %s183 = scalar_lea.vmem %s0, %s182
        %p184 = pneg %p56
        %p185 = pneg %p53
        %p186 = pneg %p77
        %p187 = pneg %p74
        %p188 = pneg %p105
        %p189 = pneg %p102
        %s190 = sand.u32 %s92, 1
        %s191 = scalar_lea.sflag [#allocation3], %s190
        %s192 = sand.u32 %s92, 1
        %s193 = smul.addr %s192, 32
        %s194 = scalar_lea.vmem [#allocation2], %s193
        %p195 = pneg %p133
        %p196 = pneg %p130
        %s197 = sand.u32 %s120, 1
        %s198 = scalar_lea.sflag [#allocation5], %s197
        %s199 = sand.u32 %s120, 1
        %s200 = smul.addr %s199, 2
        %s201 = scalar_lea.vmem [#allocation4], %s200
        %s202 = smul.u32 8, %s26
        %p203 = scmp.lt.s32.totalorder %s25, 1
        %s204 = scalar_select %p203, %s25, 1
        %p205 = scmp.lt.s32.totalorder %s202, 7
        %s206 = scalar_select %p205, %s202, 7
        %s207 = smul.addr %s204, 8
        %s208 = sadd.s32 %s206, %s207
        %s209 = smul.addr %s208, 4
        %s210 = scalar_lea.vmem %s0, %s209
        %s211 = smul.u32 8, %s26
        %s212 = smul.u32 8, %s26
        %v214 = vld [vmem:[%s210] sm:$0xf]
        %v215 = vld [vmem:[%s210 + $0x4] sm:$0xf]
        %v216 = vld [vmem:[%s210 + $0x8] sm:$0xf]
        %v217 = vld [vmem:[%s210 + $0xc] sm:$0xf]
        %v218 = vld [vmem:[%s210 + $0x10] sm:$0xf]
        %v219 = vld [vmem:[%s210 + $0x14] sm:$0xf]
        %v220 = vld [vmem:[%s210 + $0x18] sm:$0xf]
        %v221 = vld [vmem:[%s210 + $0x1c] sm:$0xf]
        %v222 = vld [vmem:[%s1] sm:$0xf]
        %v223 = vld [vmem:[%s1 + $0x4] sm:$0xf]
        %v224 = vld [vmem:[%s1 + $0x8] sm:$0xf]
        %v225 = vld [vmem:[%s1 + $0xc] sm:$0xf]
        %v226 = vld [vmem:[%s1 + $0x10] sm:$0x3]
        %v235 = vunpack.c.l.b16 %v214
        %v236 = vunpack.c.l.b16 %v215
        %v237 = vunpack.c.l.b16 %v216
        %v238 = vunpack.c.l.b16 %v217
        %v239 = vunpack.c.l.b16 %v218
        %v240 = vunpack.c.l.b16 %v219
        %v241 = vunpack.c.l.b16 %v220
        %v242 = vunpack.c.l.b16 %v221
        %v243 = vpack.c.b16 %v236, %v235
        %v244 = vpack.c.b16 %v238, %v237
        %v245 = vpack.c.b16 %v240, %v239
        %v246 = vpack.c.b16 %v242, %v241
        %v252 = vunpack.c.l.b16 %v222
        %v253 = vunpack.c.l.b16 %v223
        %v254 = vunpack.c.l.b16 %v224
        %v255 = vunpack.c.l.b16 %v225
        %v256 = vunpack.c.l.b16 %v226
        %v257 = vpack.c.b16 %v253, %v252
        %v258 = vpack.c.b16 %v255, %v254
        %v259 = vpack.c.b16 %v256, %v256
        %vm262 = vcmask 293888
        %v264 = vsel %vm262, %v243, 0
        %v267 = vsel %vm262, %v244, 0
        %v270 = vsel %vm262, %v245, 0
        %v273 = vsel %vm262, %v246, 0
        %vm275 = vcmask 1041408
        %v277 = vsel %vm275, %v259, 0
        %279 = vmatpush.bf16.msra.mxu0 0
        %280 = vmatpush.bf16.msra.mxu0 0
        %281 = vmatpush.bf16.msra.mxu0 0
        %282 = vmatpush.bf16.msra.mxu0 0
        %283 = vmatpush.bf16.msra.mxu0 0
        %284 = vmatpush.bf16.msra.mxu0 %v277
        %285 = vmatpush.bf16.msra.mxu0 %v258
        %286 = vmatpush.bf16.msra.mxu0 %v257
        %287 = vmatmul.bf16.gmra.mxu0 %v264
        %v288 = vpop.f32.mrf.mxu0
        %v289 = vadd.f32 0.0, %v288
        %v290 = vpop.f32.mrf.mxu0
        %v291 = vadd.f32 0.0, %v290
        %292 = vmatmul.bf16.gmra.mxu0 %v267
        %v293 = vpop.f32.mrf.mxu0
        %v294 = vadd.f32 0.0, %v293
        %v295 = vpop.f32.mrf.mxu0
        %v296 = vadd.f32 0.0, %v295
        %297 = vmatmul.bf16.gmra.mxu0 %v270
        %v298 = vpop.f32.mrf.mxu0
        %v299 = vadd.f32 0.0, %v298
        %v300 = vpop.f32.mrf.mxu0
        %v301 = vadd.f32 0.0, %v300
        %302 = vmatmul.bf16.gmra.mxu0 %v273
        %v303 = vpop.f32.mrf.mxu0
        %v304 = vadd.f32 0.0, %v303
        %v305 = vpop.f32.mrf.mxu0
        %v306 = vadd.f32 0.0, %v305
        %307 = vdwg.mxu0
        %v308 = vpack.c.bf16 %v289, %v289
        %v309 = vpack.c.bf16 %v291, %v291
        %v310 = vpack.c.bf16 %v294, %v294
        %v311 = vpack.c.bf16 %v296, %v296
        %v312 = vpack.c.bf16 %v299, %v299
        %v313 = vpack.c.bf16 %v301, %v301
        %v314 = vpack.c.bf16 %v304, %v304
        %v315 = vpack.c.bf16 %v306, %v306
        %316 = vst [vmem:[%s194] sm:$0xf] %v308
        %317 = vst [vmem:[%s194 + $0x4] sm:$0xf] %v309
        %318 = vst [vmem:[%s194 + $0x8] sm:$0xf] %v310
        %319 = vst [vmem:[%s194 + $0xc] sm:$0xf] %v311
        %320 = vst [vmem:[%s194 + $0x10] sm:$0xf] %v312
        %321 = vst [vmem:[%s194 + $0x14] sm:$0xf] %v313
        %322 = vst [vmem:[%s194 + $0x18] sm:$0xf] %v314
        %323 = vst [vmem:[%s194 + $0x1c] sm:$0xf] %v315
        %v324 = vadd.f32 %v289, %v291
        %v325 = vadd.f32 %v324, %v294
        %v326 = vadd.f32 %v325, %v296
        %v327 = vadd.f32 %v326, %v299
        %v328 = vadd.f32 %v327, %v301
        %v329 = vadd.f32 %v328, %v304
        %v330 = vadd.f32 %v329, %v306
        %v331 = vrot.slane %v330, 4
        %v332 = vadd.f32 %v330, %v331
        %v333 = vrot.slane %v332, 2
        %v334 = vadd.f32 %v332, %v333
        %v335 = vrot.slane %v334, 1
        %v336 = vadd.f32 %v334, %v335
        %v337 = vmul.f32 %v289, %v289
        %v338 = vmul.f32 %v291, %v291
        %v339 = vmul.f32 %v294, %v294
        %v340 = vmul.f32 %v296, %v296
        %v341 = vmul.f32 %v299, %v299
        %v342 = vmul.f32 %v301, %v301
        %v343 = vmul.f32 %v304, %v304
        %v344 = vmul.f32 %v306, %v306
        %v345 = vadd.f32 %v337, %v338
        %v346 = vadd.f32 %v345, %v339
        %v347 = vadd.f32 %v346, %v340
        %v348 = vadd.f32 %v347, %v341
        %v349 = vadd.f32 %v348, %v342
        %v350 = vadd.f32 %v349, %v343
        %v351 = vadd.f32 %v350, %v344
        %v352 = vrot.slane %v351, 4
        %v353 = vadd.f32 %v351, %v352
        %v354 = vrot.slane %v353, 2
        %v355 = vadd.f32 %v353, %v354
        %v356 = vrot.slane %v355, 1
        %v357 = vadd.f32 %v355, %v356
        %vm358 = vcmask 1040384
        %v359 = vsel %vm358, %v336, %v357
        %360 = vst [vmem:[%s201] sm:$0x3] %v359
        %s361 = sand.u32 %s92, 1
        %s362 = scalar_lea.sflag [#allocation3], %s361
        %s363 = sand.u32 %s92, 1
        %s364 = smul.addr %s363, 32
        %s365 = scalar_lea.vmem [#allocation2], %s364
        %s366 = sand.u32 %s120, 1
        %s367 = scalar_lea.sflag [#allocation5], %s366
        %s368 = sand.u32 %s120, 1
        %s369 = smul.addr %s368, 2
        %s370 = scalar_lea.vmem [#allocation4], %s369
        // Predicated region
        $region29: #{tpu_custom_call.1} parent=27 // pred_check
          %p371 = pneg %p102
        $region30: #{tpu_custom_call.1} parent=27 // pred_check_branch
          %373 = sbr.rel (%p371) target = $region32
        $region31: #{tpu_custom_call.1} parent=27 // pred_region
          %s374 = smul.u32 8, %s26
          %376 = vsyncadd %s362, 0
          %s377 = smul.addr %s25, 8
          %s378 = sadd.s32 %s374, %s377
          %s379 = smul.addr %s378, 4
          %s380 = scalar_lea.hbm %s2, %s379
          %s381 = sshll.u32 %s365, 4
          %s382 = int_to_ptr.vmem [resolvable:$true] %s381
          %s383 = sshll.u32 %s380, 4
          %s384 = int_to_ptr.hbm [resolvable:$true] %s383
          %389 = dma.vmem_to_hbm [thread:$0]  %s382, 512, %s384, %s362, 64, 64, 4
        $region32: #{tpu_custom_call.1} parent=27 // pred_fallthru
          _
        // Predicated region
        $region33: #{tpu_custom_call.1} parent=27 // pred_check
          %p390 = pneg %p130
        $region34: #{tpu_custom_call.1} parent=27 // pred_check_branch
          %392 = sbr.rel (%p390) target = $region36
        $region35: #{tpu_custom_call.1} parent=27 // pred_region
          %394 = vsyncadd %s367, 0
          %s395 = sadd.s32 %s26, %s25
          %s396 = smul.addr %s395, 2
          %s397 = scalar_lea.hbm %s3, %s396
          %s399 = sshll.u32 %s370, 4
          %s400 = int_to_ptr.vmem [resolvable:$true] %s399
          %s401 = sshll.u32 %s397, 4
          %s402 = int_to_ptr.hbm [resolvable:$true] %s401
          %404 = dma.vmem_to_hbm [thread:$0]  %s400, 32, %s402, %s367
        $region36: #{tpu_custom_call.1} parent=27 // pred_fallthru
          _
      $region28: #{tpu_custom_call.1} parent=5 // pred_fallthru
        _
      %p405 = scmp.le.s32.totalorder 2, %s16
      // Predicated region
      $region37: #{tpu_custom_call.1} parent=5 // pred_check
        %p406 = pneg %p405
      $region38: #{tpu_custom_call.1} parent=5 // pred_check_branch
        %408 = sbr.rel (%p406) target = $region40
      $region39: #{tpu_custom_call.1} parent=5 // pred_region
        %s409 = ssub.s32 %s16, 2
        // Predicated region
        $region41: #{tpu_custom_call.1} parent=39 // pred_check
          %p410 = pneg %p108
        $region42: #{tpu_custom_call.1} parent=39 // pred_check_branch
          %412 = sbr.rel (%p410) target = $region44
        $region43: #{tpu_custom_call.1} parent=39 // pred_region
          %s413 = sand.u32 %s93, 1
          %s414 = scalar_lea.sflag [#allocation3], %s413
          %s415 = sand.u32 %s93, 1
          %s416 = smul.addr %s415, 32
          %s417 = scalar_lea.vmem [#allocation2], %s416
          %419 = dma.done %s414, 512
        $region44: #{tpu_custom_call.1} parent=39 // pred_fallthru
          _
        // Predicated region
        $region45: #{tpu_custom_call.1} parent=39 // pred_check
          %p420 = pneg %p136
        $region46: #{tpu_custom_call.1} parent=39 // pred_check_branch
          %422 = sbr.rel (%p420) target = $region48
        $region47: #{tpu_custom_call.1} parent=39 // pred_region
          %s423 = sand.u32 %s121, 1
          %s424 = scalar_lea.sflag [#allocation5], %s423
          %s425 = sand.u32 %s121, 1
          %s426 = smul.addr %s425, 2
          %s427 = scalar_lea.vmem [#allocation4], %s426
          %429 = dma.done %s424, 32
        $region48: #{tpu_custom_call.1} parent=39 // pred_fallthru
          _
      $region40: #{tpu_custom_call.1} parent=5 // pred_fallthru
        _
    $region6: #{tpu_custom_call.1} parent=1 // loop_footer
      %s20 = sadd.s32 1, %s16
    $region7: #{tpu_custom_call.1} parent=1 // loop_footer_branch
      %15 = sbr.rel target = $region3
    $region8: #{tpu_custom_call.1} parent=1 // loop_exit
      _
    %430 = vsyncpa [#allocation3], 1
    %s431 = scalar_lea.sflag [#allocation3], 1
    %432 = vsyncpa %s431, 1
    %433 = vsyncpa [#allocation5], 1
    %s434 = scalar_lea.sflag [#allocation5], 1
    %435 = vsyncpa %s434, 1

</llo_original>
